<compile_context>
chip_gen: v5e
topology: v5e:2x2
jax: 0.10.0
libtpu: 0.0.40
codegen_flags: <defaults>
</compile_context>

<pallas_src>
import jax
import jax.numpy as jnp
import numpy as np
from jax.experimental import pallas as pl
from jax.experimental.pallas import tpu as pltpu


def _make_gru_kernel(T_total, Tc, H, unroll):
    """Builds the kernel with static time extents / gate width baked in."""
    needs_mask = (T_total % Tc) != 0   # last chunk contains padded timesteps?

    def kernel(x_ref, h0_ref, wih_ref, whh_ref, bi_ref, bh_ref, wfc_ref, bfc_ref,
               hT_ref, y_ref, gi_ref, hc_ref):
        # x_ref   : (Tc, Bp, E)  time chunk, time-major, batch padded to sublanes
        # h0_ref  : (Bp, H)
        # wih_ref : (E, 3H)   packed, lane order r|z|n
        # whh_ref : (H, 3H)   packed, lane order r|z|n
        # bi_ref  : (1, 3H)   [b_ir+b_hr | b_iz+b_hz | b_in]
        # bh_ref  : (1, 3H)   [0 | 0 | b_hn]
        # wfc_ref : (1, H), bfc_ref : (1, 1)
        # outputs : hT_ref (Bp, H), y_ref (Bp, 1)
        # scratch : gi_ref (Tc, Bp, 3H) packed input projections, hc_ref (Bp, H) carry
        c = pl.program_id(0)
        nc = pl.num_programs(0)
        Tc_, Bp, E = x_ref.shape
        H3 = 3 * H

        # ---- chunk 0: seed the hidden-state carry --------------------------------
        @pl.when(c == 0)
        def _():
            hc_ref[...] = h0_ref[...]

        # ---- Phase 1: fused lane-dense input projection for the whole chunk ------
        x2 = x_ref[...].reshape(Tc_ * Bp, E)            # trivial relayout (Bp = 8k)
        gi_ref[...] = (jnp.dot(x2, wih_ref[...], preferred_element_type=jnp.float32)
                       + bi_ref[...]).reshape(Tc_, Bp, H3)

        bh = bh_ref[...]                                # (1, 3H): [0 | 0 | b_hn]
        base = c * Tc_                                  # global time offset of chunk

        # ---- Phase 2: serial recurrence, one packed hidden matmul per step -------
        def step(t, h):
            gh = jnp.dot(h, whh_ref[...], preferred_element_type=jnp.float32) + bh
            gi = gi_ref[t]                                          # (Bp, 3H)
            rz = jax.nn.sigmoid(gi[:, :2 * H] + gh[:, :2 * H])      # packed r|z
            n = jnp.tanh(gi[:, 2 * H:] + rz[:, :H] * gh[:, 2 * H:])
            h_new = n + rz[:, H:] * (h - n)                         # (1-z)*n + z*h
            if needs_mask:
                # Padded timesteps of the ragged last chunk are identity updates.
                h_new = jnp.where(base + t < T_total, h_new, h)
            return h_new

        h_fin = jax.lax.fori_loop(0, Tc_, step, hc_ref[...], unroll=unroll)
        hc_ref[...] = h_fin

        # ---- Phase 3: final hidden + FC head, written once on the last chunk -----
        @pl.when(c == nc - 1)
        def _():
            hT_ref[...] = h_fin
            y_ref[...] = (jnp.sum(h_fin * wfc_ref[...], axis=-1, keepdims=True)
                          + bfc_ref[...])

    return kernel


def gru_forward(x, h0, w_ih, w_hh, b_ih, b_hh, w_fc, b_fc, time_chunk=128):
    """x: (B, T, E) batch_first; h0: (B, H). Returns (y_hat (B,1), hidden (1,B,H))."""
    B, T, E = x.shape
    H = h0.shape[-1]
    Bp = ((B + 7) // 8) * 8            # pad batch to a full sublane tile (free on TPU)
    f32 = jnp.float32

    Tc = min(T, max(1, time_chunk))    # time-chunk size (bounds VMEM, enables overlap)
    num_chunks = -(-T // Tc)
    Tp = num_chunks * Tc

    # Time-major + pad the (small) input once; the hidden-sequence output is gone
    # entirely (the module discards `hiddens`).
    x_tm = jnp.transpose(x.astype(f32), (1, 0, 2))                  # (T, B, E)
    x_tm = jnp.pad(x_tm, ((0, Tp - T), (0, Bp - B), (0, 0)))        # (Tp, Bp, E)
    h0_p = jnp.pad(h0.astype(f32), ((0, Bp - B), (0, 0)))           # (Bp, H)

    # Packed, lane-dense weights: columns ordered r | z | n (PyTorch gate order).
    wih_p = w_ih.astype(f32).T                                      # (E, 3H)
    whh_p = w_hh.astype(f32).T                                      # (H, 3H)

    bih = b_ih.astype(f32)
    bhh = b_hh.astype(f32)
    bi_p = (bih + jnp.concatenate([bhh[:2 * H], jnp.zeros((H,), f32)]))[None, :]  # (1,3H)
    bh_p = jnp.concatenate([jnp.zeros((2 * H,), f32), bhh[2 * H:]])[None, :]      # (1,3H)

    wfc_row = w_fc.astype(f32).reshape(1, H)
    bfc = b_fc.astype(f32).reshape(1, 1)

    unroll = min(Tc, 8)                # fully unroll tiny chunks, 8-deep otherwise
    kernel = _make_gru_kernel(T, Tc, H, unroll)

    # VMEM budget: packed gi scratch + double-buffered x chunk + weights + carry/out.
    itemsize = 4
    footprint = (Tc * Bp * 3 * H                       # gi scratch
                 + 2 * Tc * Bp * E                     # double-buffered x chunk
                 + 2 * ((E + H) * 3 * H + 6 * H + H + 1 + Bp * H)  # weights/biases/h0
                 + 2 * Bp * H + Bp) * itemsize         # carry + outputs
    vmem_limit = int(min(64 * 1024 * 1024, max(32 * 1024 * 1024, 2 * footprint)))

    out_shapes = (
        jax.ShapeDtypeStruct((Bp, H), f32),    # final hidden state
        jax.ShapeDtypeStruct((Bp, 1), f32),    # y_hat
    )

    hT, y = pl.pallas_call(
        kernel,
        out_shape=out_shapes,
        grid_spec=pltpu.PrefetchScalarGridSpec(
            num_scalar_prefetch=0,
            grid=(num_chunks,),
            in_specs=[
                pl.BlockSpec((Tc, Bp, E), lambda c: (c, 0, 0)),     # x time chunk
                pl.BlockSpec((Bp, H), lambda c: (0, 0)),            # h0
                pl.BlockSpec((E, 3 * H), lambda c: (0, 0)),         # W_ih packed
                pl.BlockSpec((H, 3 * H), lambda c: (0, 0)),         # W_hh packed
                pl.BlockSpec((1, 3 * H), lambda c: (0, 0)),         # folded input bias
                pl.BlockSpec((1, 3 * H), lambda c: (0, 0)),         # [0 | 0 | b_hn]
                pl.BlockSpec((1, H), lambda c: (0, 0)),             # W_fc row
                pl.BlockSpec((1, 1), lambda c: (0, 0)),             # b_fc
            ],
            out_specs=[
                pl.BlockSpec((Bp, H), lambda c: (0, 0)),
                pl.BlockSpec((Bp, 1), lambda c: (0, 0)),
            ],
            scratch_shapes=[
                pltpu.VMEM((Tc, Bp, 3 * H), f32),   # packed gi for the chunk
                pltpu.VMEM((Bp, H), f32),           # hidden-state carry across chunks
            ],
        ),
        compiler_params=pltpu.CompilerParams(
            dimension_semantics=("arbitrary",),     # chunks are sequentially dependent
            vmem_limit_bytes=vmem_limit,
        ),
    )(x_tm, h0_p, wih_p, whh_p, bi_p, bh_p, wfc_row, bfc)

    y_hat = y[:B]            # (B, 1)
    hidden = hT[:B][None]    # (1, B, H)
    return y_hat, hidden


def gru_reference(x, h0, w_ih, w_hh, b_ih, b_hh, w_fc, b_fc):
    """Pure-JAX reference matching torch.nn.GRU semantics (for validation)."""
    H = h0.shape[-1]

    def step(h, x_t):
        gi = x_t @ w_ih.T + b_ih
        gh = h @ w_hh.T + b_hh
        r = jax.nn.sigmoid(gi[:, :H] + gh[:, :H])
        z = jax.nn.sigmoid(gi[:, H:2 * H] + gh[:, H:2 * H])
        n = jnp.tanh(gi[:, 2 * H:] + r * gh[:, 2 * H:])
        h_new = (1.0 - z) * n + z * h
        return h_new, None

    x_tbe = jnp.transpose(x, (1, 0, 2))
    h_final, _ = jax.lax.scan(step, h0, x_tbe)
    y = h_final @ w_fc.T + b_fc
    return y, h_final[None]


if __name__ == "__main__":
    # Small deterministic config: batch=2, seq=8, emb=16, hidden=32
    B, T, E, H = 2, 8, 16, 32

    key = jax.random.PRNGKey(0)
    ks = jax.random.split(key, 8)
    bound = 1.0 / np.sqrt(H)  # PyTorch default uniform init range for GRU / Linear

    x = jax.random.normal(ks[0], (B, T, E), dtype=jnp.float32)
    # The module draws hidden ~ randn at forward time; made deterministic here via PRNGKey.
    h0 = jax.random.normal(ks[1], (B, H), dtype=jnp.float32)

    w_ih = jax.random.uniform(ks[2], (3 * H, E), minval=-bound, maxval=bound, dtype=jnp.float32)
    w_hh = jax.random.uniform(ks[3], (3 * H, H), minval=-bound, maxval=bound, dtype=jnp.float32)
    b_ih = jax.random.uniform(ks[4], (3 * H,), minval=-bound, maxval=bound, dtype=jnp.float32)
    b_hh = jax.random.uniform(ks[5], (3 * H,), minval=-bound, maxval=bound, dtype=jnp.float32)
    w_fc = jax.random.uniform(ks[6], (1, H), minval=-bound, maxval=bound, dtype=jnp.float32)
    b_fc = jax.random.uniform(ks[7], (1,), minval=-bound, maxval=bound, dtype=jnp.float32)

    y_hat, hidden = jax.jit(gru_forward)(x, h0, w_ih, w_hh, b_ih, b_hh, w_fc, b_fc)
    jax.block_until_ready((y_hat, hidden))

    y_ref, hidden_ref = gru_reference(x, h0, w_ih, w_hh, b_ih, b_hh, w_fc, b_fc)

    assert y_hat.shape == (B, 1) and hidden.shape == (1, B, H)
    np.testing.assert_allclose(np.asarray(y_hat), np.asarray(y_ref), rtol=1e-4, atol=2e-5)
    np.testing.assert_allclose(np.asarray(hidden), np.asarray(hidden_ref), rtol=1e-4, atol=2e-5)

    print("KERNEL_OK")
</pallas_src>

<mosaic_0001>
module attributes {stable_mosaic.version = 11 : i64} {
  func.func @kernel(%arg0: i32, %arg1: memref<8x8x16xf32, #tpu.memory_space<vmem>>, %arg2: memref<8x32xf32, #tpu.memory_space<vmem>>, %arg3: memref<16x96xf32, #tpu.memory_space<vmem>>, %arg4: memref<32x96xf32, #tpu.memory_space<vmem>>, %arg5: memref<1x96xf32, #tpu.memory_space<vmem>>, %arg6: memref<1x96xf32, #tpu.memory_space<vmem>>, %arg7: memref<1x32xf32, #tpu.memory_space<vmem>>, %arg8: memref<1x1xf32, #tpu.memory_space<vmem>>, %arg9: memref<8x32xf32, #tpu.memory_space<vmem>>, %arg10: memref<8x1xf32, #tpu.memory_space<vmem>>, %arg11: memref<8x8x96xf32, #tpu.memory_space<vmem>>, %arg12: memref<8x32xf32, #tpu.memory_space<vmem>>) attributes {dimension_semantics = [#tpu.dimension_semantics<arbitrary>], iteration_bounds = array<i64: 1>, scalar_prefetch = 0 : i64, scratch_operands = 2 : i64, tpu.core_type = #tpu.core_type<tc>, window_params = [{transform_indices = @transform_0, window_bounds = array<i64: 8, 8, 16>}, {pipeline_mode = #tpu.pipeline_mode<synchronous>, transform_indices = @transform_1, window_bounds = array<i64: 8, 32>}, {pipeline_mode = #tpu.pipeline_mode<synchronous>, transform_indices = @transform_2, window_bounds = array<i64: 16, 96>}, {pipeline_mode = #tpu.pipeline_mode<synchronous>, transform_indices = @transform_3, window_bounds = array<i64: 32, 96>}, {pipeline_mode = #tpu.pipeline_mode<synchronous>, transform_indices = @transform_4, window_bounds = array<i64: 1, 96>}, {pipeline_mode = #tpu.pipeline_mode<synchronous>, transform_indices = @transform_5, window_bounds = array<i64: 1, 96>}, {pipeline_mode = #tpu.pipeline_mode<synchronous>, transform_indices = @transform_6, window_bounds = array<i64: 1, 32>}, {pipeline_mode = #tpu.pipeline_mode<synchronous>, transform_indices = @transform_7, window_bounds = array<i64: 1, 1>}, {pipeline_mode = #tpu.pipeline_mode<synchronous>, transform_indices = @transform_8, window_bounds = array<i64: 8, 32>}, {pipeline_mode = #tpu.pipeline_mode<synchronous>, transform_indices = @transform_9, window_bounds = array<i64: 8, 1>}]} {
    %c0_i32 = arith.constant 0 : i32
    %0 = arith.cmpi eq, %arg0, %c0_i32 : i32
    %1 = arith.extui %0 : i1 to i32
    %c0_i32_0 = arith.constant 0 : i32
    %2 = arith.cmpi ne, %1, %c0_i32_0 : i32
    scf.if %2 {
      %c0_67 = arith.constant 0 : index
      %c0_68 = arith.constant 0 : index
      %218 = vector.load %arg2[%c0_67, %c0_68] : memref<8x32xf32, #tpu.memory_space<vmem>>, vector<8x32xf32>
      %c0_69 = arith.constant 0 : index
      %c0_70 = arith.constant 0 : index
      %219 = vector.load %arg12[%c0_69, %c0_70] : memref<8x32xf32, #tpu.memory_space<vmem>>, vector<8x32xf32>
      tpu.vector_store %arg12[%c0_69, %c0_70], %218 {strides = array<i32>} : memref<8x32xf32, #tpu.memory_space<vmem>>, vector<8x32xf32>,
    } else {
    }
    %c0 = arith.constant 0 : index
    %c0_1 = arith.constant 0 : index
    %c0_2 = arith.constant 0 : index
    %3 = vector.load %arg1[%c0, %c0_1, %c0_2] : memref<8x8x16xf32, #tpu.memory_space<vmem>>, vector<8x8x16xf32>
    %4 = vector.shape_cast %3 : vector<8x8x16xf32> to vector<64x16xf32>
    %c0_3 = arith.constant 0 : index
    %c0_4 = arith.constant 0 : index
    %5 = vector.load %arg3[%c0_3, %c0_4] : memref<16x96xf32, #tpu.memory_space<vmem>>, vector<16x96xf32>
    %cst = arith.constant dense<0.000000e+00> : vector<64x96xf32>
    %6 = tpu.matmul %4, %5, %cst {dimension_numbers = #tpu.dot_dimension_numbers<[1], [0], [0], [1], [0, 0, 1, 1], [], []>} : vector<64x16xf32>, vector<16x96xf32>, vector<64x96xf32> -> vector<64x96xf32>
    %c0_5 = arith.constant 0 : index
    %c0_6 = arith.constant 0 : index
    %7 = vector.load %arg5[%c0_5, %c0_6] : memref<1x96xf32, #tpu.memory_space<vmem>>, vector<1x96xf32>
    %8 = vector.broadcast %7 : vector<1x96xf32> to vector<64x96xf32>
    %9 = arith.addf %6, %8 : vector<64x96xf32>
    %10 = vector.shape_cast %9 : vector<64x96xf32> to vector<8x8x96xf32>
    %c0_7 = arith.constant 0 : index
    %c0_8 = arith.constant 0 : index
    %c0_9 = arith.constant 0 : index
    %11 = vector.load %arg11[%c0_7, %c0_8, %c0_9] : memref<8x8x96xf32, #tpu.memory_space<vmem>>, vector<8x8x96xf32>
    tpu.vector_store %arg11[%c0_7, %c0_8, %c0_9], %10 {strides = array<i32>} : memref<8x8x96xf32, #tpu.memory_space<vmem>>, vector<8x8x96xf32>,
    %c0_10 = arith.constant 0 : index
    %c0_11 = arith.constant 0 : index
    %12 = vector.load %arg6[%c0_10, %c0_11] : memref<1x96xf32, #tpu.memory_space<vmem>>, vector<1x96xf32>
    %c0_12 = arith.constant 0 : index
    %c0_13 = arith.constant 0 : index
    %13 = vector.load %arg12[%c0_12, %c0_13] : memref<8x32xf32, #tpu.memory_space<vmem>>, vector<8x32xf32>
    %c0_i32_14 = arith.constant 0 : i32
    %c0_15 = arith.constant 0 : index
    %c0_16 = arith.constant 0 : index
    %14 = vector.load %arg4[%c0_15, %c0_16] : memref<32x96xf32, #tpu.memory_space<vmem>>, vector<32x96xf32>
    %cst_17 = arith.constant dense<0.000000e+00> : vector<8x96xf32>
    %15 = tpu.matmul %13, %14, %cst_17 {dimension_numbers = #tpu.dot_dimension_numbers<[1], [0], [0], [1], [0, 0, 1, 1], [], []>} : vector<8x32xf32>, vector<32x96xf32>, vector<8x96xf32> -> vector<8x96xf32>
    %16 = vector.broadcast %12 : vector<1x96xf32> to vector<8x96xf32>
    %17 = arith.addf %15, %16 : vector<8x96xf32>
    %18 = arith.index_cast %c0_i32_14 : i32 to index
    %c0_18 = arith.constant 0 : index
    %c0_19 = arith.constant 0 : index
    %19 = vector.load %arg11[%18, %c0_18, %c0_19] : memref<8x8x96xf32, #tpu.memory_space<vmem>>, vector<1x8x96xf32>
    %20 = vector.shape_cast %19 : vector<1x8x96xf32> to vector<8x96xf32>
    %21 = vector.extract_strided_slice %20 {offsets = [0, 0], sizes = [8, 64], strides = [1, 1]} : vector<8x96xf32> to vector<8x64xf32>
    %22 = vector.extract_strided_slice %17 {offsets = [0, 0], sizes = [8, 64], strides = [1, 1]} : vector<8x96xf32> to vector<8x64xf32>
    %23 = arith.addf %21, %22 : vector<8x64xf32>
    %24 = arith.negf %23 : vector<8x64xf32>
    %25 = math.exp %24 : vector<8x64xf32>
    %cst_20 = arith.constant 1.000000e+00 : f32
    %26 = vector.broadcast %cst_20 : f32 to vector<8x64xf32>
    %27 = arith.addf %26, %25 : vector<8x64xf32>
    %28 = arith.divf %26, %27 : vector<8x64xf32>
    %29 = vector.extract_strided_slice %20 {offsets = [0, 64], sizes = [8, 32], strides = [1, 1]} : vector<8x96xf32> to vector<8x32xf32>
    %30 = vector.extract_strided_slice %28 {offsets = [0, 0], sizes = [8, 32], strides = [1, 1]} : vector<8x64xf32> to vector<8x32xf32>
    %31 = vector.extract_strided_slice %17 {offsets = [0, 64], sizes = [8, 32], strides = [1, 1]} : vector<8x96xf32> to vector<8x32xf32>
    %32 = arith.mulf %30, %31 : vector<8x32xf32>
    %33 = arith.addf %29, %32 : vector<8x32xf32>
    %34 = math.tanh %33 : vector<8x32xf32>
    %35 = vector.extract_strided_slice %28 {offsets = [0, 32], sizes = [8, 32], strides = [1, 1]} : vector<8x64xf32> to vector<8x32xf32>
    %36 = arith.subf %13, %34 : vector<8x32xf32>
    %37 = arith.mulf %35, %36 : vector<8x32xf32>
    %38 = arith.addf %34, %37 : vector<8x32xf32>
    %c1_i32 = arith.constant 1 : i32
    %c0_21 = arith.constant 0 : index
    %c0_22 = arith.constant 0 : index
    %39 = vector.load %arg4[%c0_21, %c0_22] : memref<32x96xf32, #tpu.memory_space<vmem>>, vector<32x96xf32>
    %cst_23 = arith.constant dense<0.000000e+00> : vector<8x96xf32>
    %40 = tpu.matmul %38, %39, %cst_23 {dimension_numbers = #tpu.dot_dimension_numbers<[1], [0], [0], [1], [0, 0, 1, 1], [], []>} : vector<8x32xf32>, vector<32x96xf32>, vector<8x96xf32> -> vector<8x96xf32>
    %41 = vector.broadcast %12 : vector<1x96xf32> to vector<8x96xf32>
    %42 = arith.addf %40, %41 : vector<8x96xf32>
    %43 = arith.index_cast %c1_i32 : i32 to index
    %c0_24 = arith.constant 0 : index
    %c0_25 = arith.constant 0 : index
    %44 = vector.load %arg11[%43, %c0_24, %c0_25] : memref<8x8x96xf32, #tpu.memory_space<vmem>>, vector<1x8x96xf32>
    %45 = vector.shape_cast %44 : vector<1x8x96xf32> to vector<8x96xf32>
    %46 = vector.extract_strided_slice %45 {offsets = [0, 0], sizes = [8, 64], strides = [1, 1]} : vector<8x96xf32> to vector<8x64xf32>
    %47 = vector.extract_strided_slice %42 {offsets = [0, 0], sizes = [8, 64], strides = [1, 1]} : vector<8x96xf32> to vector<8x64xf32>
    %48 = arith.addf %46, %47 : vector<8x64xf32>
    %49 = arith.negf %48 : vector<8x64xf32>
    %50 = math.exp %49 : vector<8x64xf32>
    %cst_26 = arith.constant 1.000000e+00 : f32
    %51 = vector.broadcast %cst_26 : f32 to vector<8x64xf32>
    %52 = arith.addf %51, %50 : vector<8x64xf32>
    %53 = arith.divf %51, %52 : vector<8x64xf32>
    %54 = vector.extract_strided_slice %45 {offsets = [0, 64], sizes = [8, 32], strides = [1, 1]} : vector<8x96xf32> to vector<8x32xf32>
    %55 = vector.extract_strided_slice %53 {offsets = [0, 0], sizes = [8, 32], strides = [1, 1]} : vector<8x64xf32> to vector<8x32xf32>
    %56 = vector.extract_strided_slice %42 {offsets = [0, 64], sizes = [8, 32], strides = [1, 1]} : vector<8x96xf32> to vector<8x32xf32>
    %57 = arith.mulf %55, %56 : vector<8x32xf32>
    %58 = arith.addf %54, %57 : vector<8x32xf32>
    %59 = math.tanh %58 : vector<8x32xf32>
    %60 = vector.extract_strided_slice %53 {offsets = [0, 32], sizes = [8, 32], strides = [1, 1]} : vector<8x64xf32> to vector<8x32xf32>
    %61 = arith.subf %38, %59 : vector<8x32xf32>
    %62 = arith.mulf %60, %61 : vector<8x32xf32>
    %63 = arith.addf %59, %62 : vector<8x32xf32>
    %c2_i32 = arith.constant 2 : i32
    %c0_27 = arith.constant 0 : index
    %c0_28 = arith.constant 0 : index
    %64 = vector.load %arg4[%c0_27, %c0_28] : memref<32x96xf32, #tpu.memory_space<vmem>>, vector<32x96xf32>
    %cst_29 = arith.constant dense<0.000000e+00> : vector<8x96xf32>
    %65 = tpu.matmul %63, %64, %cst_29 {dimension_numbers = #tpu.dot_dimension_numbers<[1], [0], [0], [1], [0, 0, 1, 1], [], []>} : vector<8x32xf32>, vector<32x96xf32>, vector<8x96xf32> -> vector<8x96xf32>
    %66 = vector.broadcast %12 : vector<1x96xf32> to vector<8x96xf32>
    %67 = arith.addf %65, %66 : vector<8x96xf32>
    %68 = arith.index_cast %c2_i32 : i32 to index
    %c0_30 = arith.constant 0 : index
    %c0_31 = arith.constant 0 : index
    %69 = vector.load %arg11[%68, %c0_30, %c0_31] : memref<8x8x96xf32, #tpu.memory_space<vmem>>, vector<1x8x96xf32>
    %70 = vector.shape_cast %69 : vector<1x8x96xf32> to vector<8x96xf32>
    %71 = vector.extract_strided_slice %70 {offsets = [0, 0], sizes = [8, 64], strides = [1, 1]} : vector<8x96xf32> to vector<8x64xf32>
    %72 = vector.extract_strided_slice %67 {offsets = [0, 0], sizes = [8, 64], strides = [1, 1]} : vector<8x96xf32> to vector<8x64xf32>
    %73 = arith.addf %71, %72 : vector<8x64xf32>
    %74 = arith.negf %73 : vector<8x64xf32>
    %75 = math.exp %74 : vector<8x64xf32>
    %cst_32 = arith.constant 1.000000e+00 : f32
    %76 = vector.broadcast %cst_32 : f32 to vector<8x64xf32>
    %77 = arith.addf %76, %75 : vector<8x64xf32>
    %78 = arith.divf %76, %77 : vector<8x64xf32>
    %79 = vector.extract_strided_slice %70 {offsets = [0, 64], sizes = [8, 32], strides = [1, 1]} : vector<8x96xf32> to vector<8x32xf32>
    %80 = vector.extract_strided_slice %78 {offsets = [0, 0], sizes = [8, 32], strides = [1, 1]} : vector<8x64xf32> to vector<8x32xf32>
    %81 = vector.extract_strided_slice %67 {offsets = [0, 64], sizes = [8, 32], strides = [1, 1]} : vector<8x96xf32> to vector<8x32xf32>
    %82 = arith.mulf %80, %81 : vector<8x32xf32>
    %83 = arith.addf %79, %82 : vector<8x32xf32>
    %84 = math.tanh %83 : vector<8x32xf32>
    %85 = vector.extract_strided_slice %78 {offsets = [0, 32], sizes = [8, 32], strides = [1, 1]} : vector<8x64xf32> to vector<8x32xf32>
    %86 = arith.subf %63, %84 : vector<8x32xf32>
    %87 = arith.mulf %85, %86 : vector<8x32xf32>
    %88 = arith.addf %84, %87 : vector<8x32xf32>
    %c3_i32 = arith.constant 3 : i32
    %c0_33 = arith.constant 0 : index
    %c0_34 = arith.constant 0 : index
    %89 = vector.load %arg4[%c0_33, %c0_34] : memref<32x96xf32, #tpu.memory_space<vmem>>, vector<32x96xf32>
    %cst_35 = arith.constant dense<0.000000e+00> : vector<8x96xf32>
    %90 = tpu.matmul %88, %89, %cst_35 {dimension_numbers = #tpu.dot_dimension_numbers<[1], [0], [0], [1], [0, 0, 1, 1], [], []>} : vector<8x32xf32>, vector<32x96xf32>, vector<8x96xf32> -> vector<8x96xf32>
    %91 = vector.broadcast %12 : vector<1x96xf32> to vector<8x96xf32>
    %92 = arith.addf %90, %91 : vector<8x96xf32>
    %93 = arith.index_cast %c3_i32 : i32 to index
    %c0_36 = arith.constant 0 : index
    %c0_37 = arith.constant 0 : index
    %94 = vector.load %arg11[%93, %c0_36, %c0_37] : memref<8x8x96xf32, #tpu.memory_space<vmem>>, vector<1x8x96xf32>
    %95 = vector.shape_cast %94 : vector<1x8x96xf32> to vector<8x96xf32>
    %96 = vector.extract_strided_slice %95 {offsets = [0, 0], sizes = [8, 64], strides = [1, 1]} : vector<8x96xf32> to vector<8x64xf32>
    %97 = vector.extract_strided_slice %92 {offsets = [0, 0], sizes = [8, 64], strides = [1, 1]} : vector<8x96xf32> to vector<8x64xf32>
    %98 = arith.addf %96, %97 : vector<8x64xf32>
    %99 = arith.negf %98 : vector<8x64xf32>
    %100 = math.exp %99 : vector<8x64xf32>
    %cst_38 = arith.constant 1.000000e+00 : f32
    %101 = vector.broadcast %cst_38 : f32 to vector<8x64xf32>
    %102 = arith.addf %101, %100 : vector<8x64xf32>
    %103 = arith.divf %101, %102 : vector<8x64xf32>
    %104 = vector.extract_strided_slice %95 {offsets = [0, 64], sizes = [8, 32], strides = [1, 1]} : vector<8x96xf32> to vector<8x32xf32>
    %105 = vector.extract_strided_slice %103 {offsets = [0, 0], sizes = [8, 32], strides = [1, 1]} : vector<8x64xf32> to vector<8x32xf32>
    %106 = vector.extract_strided_slice %92 {offsets = [0, 64], sizes = [8, 32], strides = [1, 1]} : vector<8x96xf32> to vector<8x32xf32>
    %107 = arith.mulf %105, %106 : vector<8x32xf32>
    %108 = arith.addf %104, %107 : vector<8x32xf32>
    %109 = math.tanh %108 : vector<8x32xf32>
    %110 = vector.extract_strided_slice %103 {offsets = [0, 32], sizes = [8, 32], strides = [1, 1]} : vector<8x64xf32> to vector<8x32xf32>
    %111 = arith.subf %88, %109 : vector<8x32xf32>
    %112 = arith.mulf %110, %111 : vector<8x32xf32>
    %113 = arith.addf %109, %112 : vector<8x32xf32>
    %c4_i32 = arith.constant 4 : i32
    %c0_39 = arith.constant 0 : index
    %c0_40 = arith.constant 0 : index
    %114 = vector.load %arg4[%c0_39, %c0_40] : memref<32x96xf32, #tpu.memory_space<vmem>>, vector<32x96xf32>
    %cst_41 = arith.constant dense<0.000000e+00> : vector<8x96xf32>
    %115 = tpu.matmul %113, %114, %cst_41 {dimension_numbers = #tpu.dot_dimension_numbers<[1], [0], [0], [1], [0, 0, 1, 1], [], []>} : vector<8x32xf32>, vector<32x96xf32>, vector<8x96xf32> -> vector<8x96xf32>
    %116 = vector.broadcast %12 : vector<1x96xf32> to vector<8x96xf32>
    %117 = arith.addf %115, %116 : vector<8x96xf32>
    %118 = arith.index_cast %c4_i32 : i32 to index
    %c0_42 = arith.constant 0 : index
    %c0_43 = arith.constant 0 : index
    %119 = vector.load %arg11[%118, %c0_42, %c0_43] : memref<8x8x96xf32, #tpu.memory_space<vmem>>, vector<1x8x96xf32>
    %120 = vector.shape_cast %119 : vector<1x8x96xf32> to vector<8x96xf32>
    %121 = vector.extract_strided_slice %120 {offsets = [0, 0], sizes = [8, 64], strides = [1, 1]} : vector<8x96xf32> to vector<8x64xf32>
    %122 = vector.extract_strided_slice %117 {offsets = [0, 0], sizes = [8, 64], strides = [1, 1]} : vector<8x96xf32> to vector<8x64xf32>
    %123 = arith.addf %121, %122 : vector<8x64xf32>
    %124 = arith.negf %123 : vector<8x64xf32>
    %125 = math.exp %124 : vector<8x64xf32>
    %cst_44 = arith.constant 1.000000e+00 : f32
    %126 = vector.broadcast %cst_44 : f32 to vector<8x64xf32>
    %127 = arith.addf %126, %125 : vector<8x64xf32>
    %128 = arith.divf %126, %127 : vector<8x64xf32>
    %129 = vector.extract_strided_slice %120 {offsets = [0, 64], sizes = [8, 32], strides = [1, 1]} : vector<8x96xf32> to vector<8x32xf32>
    %130 = vector.extract_strided_slice %128 {offsets = [0, 0], sizes = [8, 32], strides = [1, 1]} : vector<8x64xf32> to vector<8x32xf32>
    %131 = vector.extract_strided_slice %117 {offsets = [0, 64], sizes = [8, 32], strides = [1, 1]} : vector<8x96xf32> to vector<8x32xf32>
    %132 = arith.mulf %130, %131 : vector<8x32xf32>
    %133 = arith.addf %129, %132 : vector<8x32xf32>
    %134 = math.tanh %133 : vector<8x32xf32>
    %135 = vector.extract_strided_slice %128 {offsets = [0, 32], sizes = [8, 32], strides = [1, 1]} : vector<8x64xf32> to vector<8x32xf32>
    %136 = arith.subf %113, %134 : vector<8x32xf32>
    %137 = arith.mulf %135, %136 : vector<8x32xf32>
    %138 = arith.addf %134, %137 : vector<8x32xf32>
    %c5_i32 = arith.constant 5 : i32
    %c0_45 = arith.constant 0 : index
    %c0_46 = arith.constant 0 : index
    %139 = vector.load %arg4[%c0_45, %c0_46] : memref<32x96xf32, #tpu.memory_space<vmem>>, vector<32x96xf32>
    %cst_47 = arith.constant dense<0.000000e+00> : vector<8x96xf32>
    %140 = tpu.matmul %138, %139, %cst_47 {dimension_numbers = #tpu.dot_dimension_numbers<[1], [0], [0], [1], [0, 0, 1, 1], [], []>} : vector<8x32xf32>, vector<32x96xf32>, vector<8x96xf32> -> vector<8x96xf32>
    %141 = vector.broadcast %12 : vector<1x96xf32> to vector<8x96xf32>
    %142 = arith.addf %140, %141 : vector<8x96xf32>
    %143 = arith.index_cast %c5_i32 : i32 to index
    %c0_48 = arith.constant 0 : index
    %c0_49 = arith.constant 0 : index
    %144 = vector.load %arg11[%143, %c0_48, %c0_49] : memref<8x8x96xf32, #tpu.memory_space<vmem>>, vector<1x8x96xf32>
    %145 = vector.shape_cast %144 : vector<1x8x96xf32> to vector<8x96xf32>
    %146 = vector.extract_strided_slice %145 {offsets = [0, 0], sizes = [8, 64], strides = [1, 1]} : vector<8x96xf32> to vector<8x64xf32>
    %147 = vector.extract_strided_slice %142 {offsets = [0, 0], sizes = [8, 64], strides = [1, 1]} : vector<8x96xf32> to vector<8x64xf32>
    %148 = arith.addf %146, %147 : vector<8x64xf32>
    %149 = arith.negf %148 : vector<8x64xf32>
    %150 = math.exp %149 : vector<8x64xf32>
    %cst_50 = arith.constant 1.000000e+00 : f32
    %151 = vector.broadcast %cst_50 : f32 to vector<8x64xf32>
    %152 = arith.addf %151, %150 : vector<8x64xf32>
    %153 = arith.divf %151, %152 : vector<8x64xf32>
    %154 = vector.extract_strided_slice %145 {offsets = [0, 64], sizes = [8, 32], strides = [1, 1]} : vector<8x96xf32> to vector<8x32xf32>
    %155 = vector.extract_strided_slice %153 {offsets = [0, 0], sizes = [8, 32], strides = [1, 1]} : vector<8x64xf32> to vector<8x32xf32>
    %156 = vector.extract_strided_slice %142 {offsets = [0, 64], sizes = [8, 32], strides = [1, 1]} : vector<8x96xf32> to vector<8x32xf32>
    %157 = arith.mulf %155, %156 : vector<8x32xf32>
    %158 = arith.addf %154, %157 : vector<8x32xf32>
    %159 = math.tanh %158 : vector<8x32xf32>
    %160 = vector.extract_strided_slice %153 {offsets = [0, 32], sizes = [8, 32], strides = [1, 1]} : vector<8x64xf32> to vector<8x32xf32>
    %161 = arith.subf %138, %159 : vector<8x32xf32>
    %162 = arith.mulf %160, %161 : vector<8x32xf32>
    %163 = arith.addf %159, %162 : vector<8x32xf32>
    %c6_i32 = arith.constant 6 : i32
    %c0_51 = arith.constant 0 : index
    %c0_52 = arith.constant 0 : index
    %164 = vector.load %arg4[%c0_51, %c0_52] : memref<32x96xf32, #tpu.memory_space<vmem>>, vector<32x96xf32>
    %cst_53 = arith.constant dense<0.000000e+00> : vector<8x96xf32>
    %165 = tpu.matmul %163, %164, %cst_53 {dimension_numbers = #tpu.dot_dimension_numbers<[1], [0], [0], [1], [0, 0, 1, 1], [], []>} : vector<8x32xf32>, vector<32x96xf32>, vector<8x96xf32> -> vector<8x96xf32>
    %166 = vector.broadcast %12 : vector<1x96xf32> to vector<8x96xf32>
    %167 = arith.addf %165, %166 : vector<8x96xf32>
    %168 = arith.index_cast %c6_i32 : i32 to index
    %c0_54 = arith.constant 0 : index
    %c0_55 = arith.constant 0 : index
    %169 = vector.load %arg11[%168, %c0_54, %c0_55] : memref<8x8x96xf32, #tpu.memory_space<vmem>>, vector<1x8x96xf32>
    %170 = vector.shape_cast %169 : vector<1x8x96xf32> to vector<8x96xf32>
    %171 = vector.extract_strided_slice %170 {offsets = [0, 0], sizes = [8, 64], strides = [1, 1]} : vector<8x96xf32> to vector<8x64xf32>
    %172 = vector.extract_strided_slice %167 {offsets = [0, 0], sizes = [8, 64], strides = [1, 1]} : vector<8x96xf32> to vector<8x64xf32>
    %173 = arith.addf %171, %172 : vector<8x64xf32>
    %174 = arith.negf %173 : vector<8x64xf32>
    %175 = math.exp %174 : vector<8x64xf32>
    %cst_56 = arith.constant 1.000000e+00 : f32
    %176 = vector.broadcast %cst_56 : f32 to vector<8x64xf32>
    %177 = arith.addf %176, %175 : vector<8x64xf32>
    %178 = arith.divf %176, %177 : vector<8x64xf32>
    %179 = vector.extract_strided_slice %170 {offsets = [0, 64], sizes = [8, 32], strides = [1, 1]} : vector<8x96xf32> to vector<8x32xf32>
    %180 = vector.extract_strided_slice %178 {offsets = [0, 0], sizes = [8, 32], strides = [1, 1]} : vector<8x64xf32> to vector<8x32xf32>
    %181 = vector.extract_strided_slice %167 {offsets = [0, 64], sizes = [8, 32], strides = [1, 1]} : vector<8x96xf32> to vector<8x32xf32>
    %182 = arith.mulf %180, %181 : vector<8x32xf32>
    %183 = arith.addf %179, %182 : vector<8x32xf32>
    %184 = math.tanh %183 : vector<8x32xf32>
    %185 = vector.extract_strided_slice %178 {offsets = [0, 32], sizes = [8, 32], strides = [1, 1]} : vector<8x64xf32> to vector<8x32xf32>
    %186 = arith.subf %163, %184 : vector<8x32xf32>
    %187 = arith.mulf %185, %186 : vector<8x32xf32>
    %188 = arith.addf %184, %187 : vector<8x32xf32>
    %c7_i32 = arith.constant 7 : i32
    %c0_57 = arith.constant 0 : index
    %c0_58 = arith.constant 0 : index
    %189 = vector.load %arg4[%c0_57, %c0_58] : memref<32x96xf32, #tpu.memory_space<vmem>>, vector<32x96xf32>
    %cst_59 = arith.constant dense<0.000000e+00> : vector<8x96xf32>
    %190 = tpu.matmul %188, %189, %cst_59 {dimension_numbers = #tpu.dot_dimension_numbers<[1], [0], [0], [1], [0, 0, 1, 1], [], []>} : vector<8x32xf32>, vector<32x96xf32>, vector<8x96xf32> -> vector<8x96xf32>
    %191 = vector.broadcast %12 : vector<1x96xf32> to vector<8x96xf32>
    %192 = arith.addf %190, %191 : vector<8x96xf32>
    %193 = arith.index_cast %c7_i32 : i32 to index
    %c0_60 = arith.constant 0 : index
    %c0_61 = arith.constant 0 : index
    %194 = vector.load %arg11[%193, %c0_60, %c0_61] : memref<8x8x96xf32, #tpu.memory_space<vmem>>, vector<1x8x96xf32>
    %195 = vector.shape_cast %194 : vector<1x8x96xf32> to vector<8x96xf32>
    %196 = vector.extract_strided_slice %195 {offsets = [0, 0], sizes = [8, 64], strides = [1, 1]} : vector<8x96xf32> to vector<8x64xf32>
    %197 = vector.extract_strided_slice %192 {offsets = [0, 0], sizes = [8, 64], strides = [1, 1]} : vector<8x96xf32> to vector<8x64xf32>
    %198 = arith.addf %196, %197 : vector<8x64xf32>
    %199 = arith.negf %198 : vector<8x64xf32>
    %200 = math.exp %199 : vector<8x64xf32>
    %cst_62 = arith.constant 1.000000e+00 : f32
    %201 = vector.broadcast %cst_62 : f32 to vector<8x64xf32>
    %202 = arith.addf %201, %200 : vector<8x64xf32>
    %203 = arith.divf %201, %202 : vector<8x64xf32>
    %204 = vector.extract_strided_slice %195 {offsets = [0, 64], sizes = [8, 32], strides = [1, 1]} : vector<8x96xf32> to vector<8x32xf32>
    %205 = vector.extract_strided_slice %203 {offsets = [0, 0], sizes = [8, 32], strides = [1, 1]} : vector<8x64xf32> to vector<8x32xf32>
    %206 = vector.extract_strided_slice %192 {offsets = [0, 64], sizes = [8, 32], strides = [1, 1]} : vector<8x96xf32> to vector<8x32xf32>
    %207 = arith.mulf %205, %206 : vector<8x32xf32>
    %208 = arith.addf %204, %207 : vector<8x32xf32>
    %209 = math.tanh %208 : vector<8x32xf32>
    %210 = vector.extract_strided_slice %203 {offsets = [0, 32], sizes = [8, 32], strides = [1, 1]} : vector<8x64xf32> to vector<8x32xf32>
    %211 = arith.subf %188, %209 : vector<8x32xf32>
    %212 = arith.mulf %210, %211 : vector<8x32xf32>
    %213 = arith.addf %209, %212 : vector<8x32xf32>
    %c8_i32 = arith.constant 8 : i32
    %c0_63 = arith.constant 0 : index
    %c0_64 = arith.constant 0 : index
    %214 = vector.load %arg12[%c0_63, %c0_64] : memref<8x32xf32, #tpu.memory_space<vmem>>, vector<8x32xf32>
    tpu.vector_store %arg12[%c0_63, %c0_64], %213 {strides = array<i32>} : memref<8x32xf32, #tpu.memory_space<vmem>>, vector<8x32xf32>,
    %c0_i32_65 = arith.constant 0 : i32
    %215 = arith.cmpi eq, %arg0, %c0_i32_65 : i32
    %216 = arith.extui %215 : i1 to i32
    %c0_i32_66 = arith.constant 0 : i32
    %217 = arith.cmpi ne, %216, %c0_i32_66 : i32
    scf.if %217 {
      %c0_67 = arith.constant 0 : index
      %c0_68 = arith.constant 0 : index
      %218 = vector.load %arg9[%c0_67, %c0_68] : memref<8x32xf32, #tpu.memory_space<vmem>>, vector<8x32xf32>
      tpu.vector_store %arg9[%c0_67, %c0_68], %213 {strides = array<i32>} : memref<8x32xf32, #tpu.memory_space<vmem>>, vector<8x32xf32>,
      %c0_69 = arith.constant 0 : index
      %c0_70 = arith.constant 0 : index
      %219 = vector.load %arg7[%c0_69, %c0_70] : memref<1x32xf32, #tpu.memory_space<vmem>>, vector<1x32xf32>
      %220 = vector.broadcast %219 : vector<1x32xf32> to vector<8x32xf32>
      %221 = arith.mulf %213, %220 : vector<8x32xf32>
      %cst_71 = arith.constant dense<0.000000e+00> : vector<8xf32>
      %222 = vector.multi_reduction <add>, %221, %cst_71 [1] : vector<8x32xf32> to vector<8xf32>
      %223 = vector.shape_cast %222 : vector<8xf32> to vector<8x1xf32>
      %c0_72 = arith.constant 0 : index
      %c0_73 = arith.constant 0 : index
      %224 = vector.load %arg8[%c0_72, %c0_73] : memref<1x1xf32, #tpu.memory_space<vmem>>, vector<1x1xf32>
      %225 = vector.broadcast %224 : vector<1x1xf32> to vector<8x1xf32>
      %226 = arith.addf %223, %225 : vector<8x1xf32>
      %c0_74 = arith.constant 0 : index
      %c0_75 = arith.constant 0 : index
      %227 = vector.load %arg10[%c0_74, %c0_75] : memref<8x1xf32, #tpu.memory_space<vmem>>, vector<8x1xf32>
      tpu.vector_store %arg10[%c0_74, %c0_75], %226 {strides = array<i32>} : memref<8x1xf32, #tpu.memory_space<vmem>>, vector<8x1xf32>,
    } else {
    }
    return
  }
  func.func @transform_0(%arg0: i32) -> (i32, i32, i32) {
    %c0_i32 = arith.constant 0 : i32
    %c0_i32_0 = arith.constant 0 : i32
    %c0_i32_1 = arith.constant 0 : i32
    return %arg0, %c0_i32, %c0_i32_0 : i32, i32, i32
  }
  func.func @transform_1(%arg0: i32) -> (i32, i32) {
    %c0_i32 = arith.constant 0 : i32
    %c0_i32_0 = arith.constant 0 : i32
    %c0_i32_1 = arith.constant 0 : i32
    return %c0_i32, %c0_i32_0 : i32, i32
  }
  func.func @transform_2(%arg0: i32) -> (i32, i32) {
    %c0_i32 = arith.constant 0 : i32
    %c0_i32_0 = arith.constant 0 : i32
    %c0_i32_1 = arith.constant 0 : i32
    return %c0_i32, %c0_i32_0 : i32, i32
  }
  func.func @transform_3(%arg0: i32) -> (i32, i32) {
    %c0_i32 = arith.constant 0 : i32
    %c0_i32_0 = arith.constant 0 : i32
    %c0_i32_1 = arith.constant 0 : i32
    return %c0_i32, %c0_i32_0 : i32, i32
  }
  func.func @transform_4(%arg0: i32) -> (i32, i32) {
    %c0_i32 = arith.constant 0 : i32
    %c0_i32_0 = arith.constant 0 : i32
    %c0_i32_1 = arith.constant 0 : i32
    return %c0_i32, %c0_i32_0 : i32, i32
  }
  func.func @transform_5(%arg0: i32) -> (i32, i32) {
    %c0_i32 = arith.constant 0 : i32
    %c0_i32_0 = arith.constant 0 : i32
    %c0_i32_1 = arith.constant 0 : i32
    return %c0_i32, %c0_i32_0 : i32, i32
  }
  func.func @transform_6(%arg0: i32) -> (i32, i32) {
    %c0_i32 = arith.constant 0 : i32
    %c0_i32_0 = arith.constant 0 : i32
    %c0_i32_1 = arith.constant 0 : i32
    return %c0_i32, %c0_i32_0 : i32, i32
  }
  func.func @transform_7(%arg0: i32) -> (i32, i32) {
    %c0_i32 = arith.constant 0 : i32
    %c0_i32_0 = arith.constant 0 : i32
    %c0_i32_1 = arith.constant 0 : i32
    return %c0_i32, %c0_i32_0 : i32, i32
  }
  func.func @transform_8(%arg0: i32) -> (i32, i32) {
    %c0_i32 = arith.constant 0 : i32
    %c0_i32_0 = arith.constant 0 : i32
    %c0_i32_1 = arith.constant 0 : i32
    return %c0_i32, %c0_i32_0 : i32, i32
  }
  func.func @transform_9(%arg0: i32) -> (i32, i32) {
    %c0_i32 = arith.constant 0 : i32
    %c0_i32_0 = arith.constant 0 : i32
    %c0_i32_1 = arith.constant 0 : i32
    return %c0_i32, %c0_i32_0 : i32, i32
  }
}

</mosaic_0001>

<llo_original>
// kernel: gru_forward.1
$region0: #{gru_forward.1}
  #allocation0 [shape = 'u32[]', space=smem, size = 0x4, offset = 0x4, fixed_abs, tag = 'smem constant byte address 0x4 - core index']
  #allocation1 [shape = 'u32[72,128]{1,0:T(1,128)}', space=vmem, size = 0x9000, scoped, tag = 'internal scratch']
  #allocation2 [shape = 'f32[8,8,96]{2,1,0:T(8,128)}', space=vmem, size = 0x8000, scoped, tag = 'scratch operand']
  #allocation3 [shape = 'f32[8,32]{1,0:T(8,128)}', space=vmem, size = 0x1000, scoped, tag = 'scratch operand']
  #allocation4 [shape = 'f32[1,1]{1,0:T(1,128)S(1)}', space=vmem, size = 0x200, scoped, tag = 'scoped memory for gru_forward.1']
  %s0 = inlined_call_operand.vmem [shape: f32[8,8,16], index: 0, kind: input, shape index: {}]
  %s1 = inlined_call_operand.vmem [shape: f32[8,32], index: 1, kind: input, shape index: {}]
  %s2 = inlined_call_operand.vmem [shape: f32[16,96], index: 2, kind: input, shape index: {}]
  %s3 = inlined_call_operand.vmem [shape: f32[32,96], index: 3, kind: input, shape index: {}]
  %s4 = inlined_call_operand.vmem [shape: f32[1,96], index: 4, kind: input, shape index: {}]
  %s5 = inlined_call_operand.vmem [shape: f32[1,96], index: 5, kind: input, shape index: {}]
  %s6 = inlined_call_operand.vmem [shape: f32[1,32], index: 6, kind: input, shape index: {}]
  %s7 = inlined_call_operand.<no memory space> [shape: f32[1,1], index: 7, kind: input, shape index: {}]
  %s8 = inlined_call_operand.vmem [shape: f32[8,32], index: 8, kind: output, shape index: {0}]
  %s9 = inlined_call_operand.vmem [shape: f32[8,1], index: 9, kind: output, shape index: {1}]
  %10 = xla_tuple %s8, %s9
  %s11 = sld [smem:[#allocation0]]
  $region58: #{gru_forward.1} parent=0
    _
  %s13 = ssub.s32 1, %s11
  %s14 = scalar_select 0, %s13, %s11
  %v15 = vstv %s7
  %16 = vst [vmem:[#allocation4] sm:$0x1] %v15
  // Predicated region
  $region2: #{gru_forward.1} parent=0 // pred_check
    _
  $region3: #{gru_forward.1} parent=0 // pred_check_branch
    %18 = sbr.rel (0) target = $region5
  $region4: #{gru_forward.1} parent=0 // pred_region
    _
  $region5: #{gru_forward.1} parent=0 // pred_fallthru
    _
  // Predicated region
  $region6: #{gru_forward.1} parent=0 // pred_check
    _
  $region7: #{gru_forward.1} parent=0 // pred_check_branch
    %20 = sbr.rel (0) target = $region9
  $region8: #{gru_forward.1} parent=0 // pred_region
    _
  $region9: #{gru_forward.1} parent=0 // pred_fallthru
    _
  // Predicated region
  $region10: #{gru_forward.1} parent=0 // pred_check
    _
  $region11: #{gru_forward.1} parent=0 // pred_check_branch
    %22 = sbr.rel (0) target = $region13
  $region12: #{gru_forward.1} parent=0 // pred_region
    _
  $region13: #{gru_forward.1} parent=0 // pred_fallthru
    _
  // Predicated region
  $region14: #{gru_forward.1} parent=0 // pred_check
    _
  $region15: #{gru_forward.1} parent=0 // pred_check_branch
    %24 = sbr.rel (0) target = $region17
  $region16: #{gru_forward.1} parent=0 // pred_region
    _
  $region17: #{gru_forward.1} parent=0 // pred_fallthru
    _
  // Predicated region
  $region18: #{gru_forward.1} parent=0 // pred_check
    _
  $region19: #{gru_forward.1} parent=0 // pred_check_branch
    %26 = sbr.rel (0) target = $region21
  $region20: #{gru_forward.1} parent=0 // pred_region
    _
  $region21: #{gru_forward.1} parent=0 // pred_fallthru
    _
  // Predicated region
  $region22: #{gru_forward.1} parent=0 // pred_check
    _
  $region23: #{gru_forward.1} parent=0 // pred_check_branch
    %28 = sbr.rel (0) target = $region25
  $region24: #{gru_forward.1} parent=0 // pred_region
    _
  $region25: #{gru_forward.1} parent=0 // pred_fallthru
    _
  // Predicated region
  $region26: #{gru_forward.1} parent=0 // pred_check
    _
  $region27: #{gru_forward.1} parent=0 // pred_check_branch
    %30 = sbr.rel (0) target = $region29
  $region28: #{gru_forward.1} parent=0 // pred_region
    _
  $region29: #{gru_forward.1} parent=0 // pred_fallthru
    _
  // Predicated region
  $region30: #{gru_forward.1} parent=0 // pred_check
    _
  $region31: #{gru_forward.1} parent=0 // pred_check_branch
    %32 = sbr.rel (0) target = $region33
  $region32: #{gru_forward.1} parent=0 // pred_region
    _
  $region33: #{gru_forward.1} parent=0 // pred_fallthru
    _
  %p33 = scmp.eq.s32.totalorder 0, 0
  // Predicated region
  $region34: #{gru_forward.1} parent=0 // pred_check
    %p34 = pneg %p33
  $region35: #{gru_forward.1} parent=0 // pred_check_branch
    %36 = sbr.rel (%p34) target = $region37
  $region36: #{gru_forward.1} parent=0 // pred_region
    %v37 = vld [vmem:[%s1] sm:$0xff]
    %vm38 = vcmask 261120
    %39 = vst.msk [vmem:[#allocation3] sm:$0xff] %vm38, %v37
  $region37: #{gru_forward.1} parent=0 // pred_fallthru
    _
  %v40 = vld [vmem:[%s0] sm:$0xff]
  %v41 = vld [vmem:[%s0 + $0x8] sm:$0xff]
  %v42 = vld [vmem:[%s0 + $0x10] sm:$0xff]
  %v43 = vld [vmem:[%s0 + $0x18] sm:$0xff]
  %v44 = vld [vmem:[%s0 + $0x20] sm:$0xff]
  %v45 = vld [vmem:[%s0 + $0x28] sm:$0xff]
  %v46 = vld [vmem:[%s0 + $0x30] sm:$0xff]
  %v47 = vld [vmem:[%s0 + $0x38] sm:$0xff]
  %v48 = vld [vmem:[%s2] sm:$0xff]
  %v49 = vld [vmem:[%s2 + $0x8] sm:$0xff]
  %v50 = vld [vmem:[%s4] sm:$0x1]
  %v52 = vperm.slane %v50, 0
  %vm54 = vcmask 130048
  %v56 = vsel %vm54, %v40, 0
  %v59 = vsel %vm54, %v41, 0
  %v62 = vsel %vm54, %v42, 0
  %v65 = vsel %vm54, %v43, 0
  %v68 = vsel %vm54, %v44, 0
  %v71 = vsel %vm54, %v45, 0
  %v74 = vsel %vm54, %v46, 0
  %v77 = vsel %vm54, %v47, 0
  %79 = vmatpush.msra.mxu0 0.0
  %80 = vmatpush.msra.mxu0 0.0
  %81 = vmatpush.msra.mxu0 0.0
  %82 = vmatpush.msra.mxu0 0.0
  %83 = vmatpush.msra.mxu0 0.0
  %84 = vmatpush.msra.mxu0 0.0
  %85 = vmatpush.msra.mxu0 0.0
  %86 = vmatpush.msra.mxu0 0.0
  %87 = vmatpush.msra.mxu0 0.0
  %88 = vmatpush.msra.mxu0 0.0
  %89 = vmatpush.msra.mxu0 0.0
  %90 = vmatpush.msra.mxu0 0.0
  %91 = vmatpush.msra.mxu0 0.0
  %92 = vmatpush.msra.mxu0 0.0
  %93 = vmatpush.msra.mxu0 %v49
  %94 = vmatpush.msra.mxu0 %v48
  %95 = vmatmul.f32.gmra.mxu0 %v56
  %v96 = vpop.f32.mrf.mxu0
  %v97 = vadd.f32 %v52, %v96
  %98 = vmatmul.f32.gmra.mxu0 %v59
  %v99 = vpop.f32.mrf.mxu0
  %v100 = vadd.f32 %v52, %v99
  %101 = vmatmul.f32.gmra.mxu0 %v62
  %v102 = vpop.f32.mrf.mxu0
  %v103 = vadd.f32 %v52, %v102
  %104 = vmatmul.f32.gmra.mxu0 %v65
  %v105 = vpop.f32.mrf.mxu0
  %v106 = vadd.f32 %v52, %v105
  %107 = vmatmul.f32.gmra.mxu0 %v68
  %v108 = vpop.f32.mrf.mxu0
  %v109 = vadd.f32 %v52, %v108
  %110 = vmatmul.f32.gmra.mxu0 %v71
  %v111 = vpop.f32.mrf.mxu0
  %v112 = vadd.f32 %v52, %v111
  %113 = vmatmul.f32.gmra.mxu0 %v74
  %v114 = vpop.f32.mrf.mxu0
  %v115 = vadd.f32 %v52, %v114
  %116 = vmatmul.f32.gmra.mxu0 %v77
  %v117 = vpop.f32.mrf.mxu0
  %v118 = vadd.f32 %v52, %v117
  %119 = vdwg.mxu0
  %vm120 = vcmask 785408
  %121 = vst.msk [vmem:[#allocation2] sm:$0xff] %vm120, %v97
  %122 = vst.msk [vmem:[#allocation2 + $0x8] sm:$0xff] %vm120, %v100
  %123 = vst.msk [vmem:[#allocation2 + $0x10] sm:$0xff] %vm120, %v103
  %124 = vst.msk [vmem:[#allocation2 + $0x18] sm:$0xff] %vm120, %v106
  %125 = vst.msk [vmem:[#allocation2 + $0x20] sm:$0xff] %vm120, %v109
  %126 = vst.msk [vmem:[#allocation2 + $0x28] sm:$0xff] %vm120, %v112
  %127 = vst.msk [vmem:[#allocation2 + $0x30] sm:$0xff] %vm120, %v115
  %128 = vst.msk [vmem:[#allocation2 + $0x38] sm:$0xff] %vm120, %v118
  %v129 = vld [vmem:[%s5] sm:$0x1]
  %v130 = vld [vmem:[#allocation3] sm:$0xff]
  %v131 = vld [vmem:[%s3] sm:$0xff]
  %v132 = vld [vmem:[%s3 + $0x8] sm:$0xff]
  %v133 = vld [vmem:[%s3 + $0x10] sm:$0xff]
  %v134 = vld [vmem:[%s3 + $0x18] sm:$0xff]
  %v136 = vperm.slane %v129, 0
  %vm138 = vcmask 261120
  %v140 = vsel %vm138, %v130, 0
  %142 = vmatpush.msra.mxu0 0.0
  %143 = vmatpush.msra.mxu0 0.0
  %144 = vmatpush.msra.mxu0 0.0
  %145 = vmatpush.msra.mxu0 0.0
  %146 = vmatpush.msra.mxu0 0.0
  %147 = vmatpush.msra.mxu0 0.0
  %148 = vmatpush.msra.mxu0 0.0
  %149 = vmatpush.msra.mxu0 0.0
  %150 = vmatpush.msra.mxu0 0.0
  %151 = vmatpush.msra.mxu0 0.0
  %152 = vmatpush.msra.mxu0 0.0
  %153 = vmatpush.msra.mxu0 0.0
  %154 = vmatpush.msra.mxu0 %v134
  %155 = vmatpush.msra.mxu0 %v133
  %156 = vmatpush.msra.mxu0 %v132
  %157 = vmatpush.msra.mxu0 %v131
  %158 = vmatmul.f32.gmra.mxu0 %v140
  %v159 = vpop.f32.mrf.mxu0
  %v160 = vadd.f32 %v136, %v159
  %161 = vdwg.mxu0
  %v162 = vld [vmem:[#allocation2] sm:$0xff]
  %v163 = vadd.f32 %v162, %v160
  %v164 = vxor.u32 %v163, 2147483648
  %v165 = vmul.f32 %v164, 1.442695
  %v166 = vpow.pop %v165
  %v167 = vadd.f32 %v166, 1.0
  %v168 = vrcp.pop %v167
  %v169 = vmul.f32 %v167, %v168
  %v170 = vsub.f32 1.0, %v169
  %v171 = vmul.f32 %v168, %v170
  %v172 = vadd.f32 %v168, %v171
  %vm173 = vweird.f32 %v167
  %vm174 = vweird.f32 %v168
  %vm175 = vmor %vm173, %vm174
  %v176 = vsel %vm175, %v168, %v172
  %v177 = vand.u32 2147483647, %v167
  %vm178 = vcmp.eq.f32.partialorder %v177, 8.507059e+37
  %v179 = vand.u32 %v167, 2147483648
  %v180 = vor.u32 1.1754944e-38, %v179
  %v181 = vsel %vm178, %v180, %v176
  %v182 = vmul.f32 1.0, %v181
  %184 = vrot.lane.b32.xlu0 %v160, 64
  %v185 = vpop.permute.xlu0 %184
  %v187 = vmul.f32 %v182, %v185
  %189 = vrot.lane.b32.xlu0 %v187, 64
  %v190 = vpop.permute.xlu0 %189
  %v192 = vadd.f32 %v162, %v190
  %v193 = vtanh.pop %v192
  %195 = vrot.lane.b32.xlu0 %v193, 64
  %v196 = vpop.permute.xlu0 %195
  %v198 = vsub.f32 %v130, %v196
  %200 = vrot.lane.b32.xlu0 %v198, 32
  %v201 = vpop.permute.xlu0 %200
  %v203 = vmul.f32 %v182, %v201
  %205 = vrot.lane.b32.xlu0 %v203, 32
  %v206 = vpop.permute.xlu0 %205
  %v208 = vadd.f32 %v193, %v206
  %210 = vrot.lane.b32.xlu0 %v208, 64
  %v211 = vpop.permute.xlu0 %210
  %v212 = vsel %vm138, %v211, 0
  %214 = vmatpush.msra.mxu0 0.0
  %215 = vmatpush.msra.mxu0 0.0
  %216 = vmatpush.msra.mxu0 0.0
  %217 = vmatpush.msra.mxu0 0.0
  %218 = vmatpush.msra.mxu0 0.0
  %219 = vmatpush.msra.mxu0 0.0
  %220 = vmatpush.msra.mxu0 0.0
  %221 = vmatpush.msra.mxu0 0.0
  %222 = vmatpush.msra.mxu0 0.0
  %223 = vmatpush.msra.mxu0 0.0
  %224 = vmatpush.msra.mxu0 0.0
  %225 = vmatpush.msra.mxu0 0.0
  %226 = vmatpush.msra.mxu0 %v134
  %227 = vmatpush.msra.mxu0 %v133
  %228 = vmatpush.msra.mxu0 %v132
  %229 = vmatpush.msra.mxu0 %v131
  %230 = vmatmul.f32.gmra.mxu0 %v212
  %v231 = vpop.f32.mrf.mxu0
  %v232 = vadd.f32 %v136, %v231
  %233 = vdwg.mxu0
  %s234 = scalar_lea.vmem [#allocation2], 8
  %v235 = vld [vmem:[%s234] sm:$0xff]
  %v236 = vadd.f32 %v235, %v232
  %v237 = vxor.u32 %v236, 2147483648
  %v238 = vmul.f32 %v237, 1.442695
  %v239 = vpow.pop %v238
  %v240 = vadd.f32 %v239, 1.0
  %v241 = vrcp.pop %v240
  %v242 = vmul.f32 %v240, %v241
  %v243 = vsub.f32 1.0, %v242
  %v244 = vmul.f32 %v241, %v243
  %v245 = vadd.f32 %v241, %v244
  %vm246 = vweird.f32 %v240
  %vm247 = vweird.f32 %v241
  %vm248 = vmor %vm246, %vm247
  %v249 = vsel %vm248, %v241, %v245
  %v250 = vand.u32 2147483647, %v240
  %vm251 = vcmp.eq.f32.partialorder %v250, 8.507059e+37
  %v252 = vand.u32 %v240, 2147483648
  %v253 = vor.u32 1.1754944e-38, %v252
  %v254 = vsel %vm251, %v253, %v249
  %v255 = vmul.f32 1.0, %v254
  %257 = vrot.lane.b32.xlu0 %v232, 64
  %v258 = vpop.permute.xlu0 %257
  %v260 = vmul.f32 %v255, %v258
  %262 = vrot.lane.b32.xlu0 %v260, 64
  %v263 = vpop.permute.xlu0 %262
  %v265 = vadd.f32 %v235, %v263
  %v266 = vtanh.pop %v265
  %v267 = vsub.f32 %v208, %v266
  %269 = vrot.lane.b32.xlu0 %v267, 96
  %v270 = vpop.permute.xlu0 %269
  %v272 = vmul.f32 %v255, %v270
  %274 = vrot.lane.b32.xlu0 %v272, 32
  %v275 = vpop.permute.xlu0 %274
  %v277 = vadd.f32 %v266, %v275
  %279 = vrot.lane.b32.xlu0 %v277, 64
  %v280 = vpop.permute.xlu0 %279
  %v281 = vsel %vm138, %v280, 0
  %283 = vmatpush.msra.mxu0 0.0
  %284 = vmatpush.msra.mxu0 0.0
  %285 = vmatpush.msra.mxu0 0.0
  %286 = vmatpush.msra.mxu0 0.0
  %287 = vmatpush.msra.mxu0 0.0
  %288 = vmatpush.msra.mxu0 0.0
  %289 = vmatpush.msra.mxu0 0.0
  %290 = vmatpush.msra.mxu0 0.0
  %291 = vmatpush.msra.mxu0 0.0
  %292 = vmatpush.msra.mxu0 0.0
  %293 = vmatpush.msra.mxu0 0.0
  %294 = vmatpush.msra.mxu0 0.0
  %295 = vmatpush.msra.mxu0 %v134
  %296 = vmatpush.msra.mxu0 %v133
  %297 = vmatpush.msra.mxu0 %v132
  %298 = vmatpush.msra.mxu0 %v131
  %299 = vmatmul.f32.gmra.mxu0 %v281
  %v300 = vpop.f32.mrf.mxu0
  %v301 = vadd.f32 %v136, %v300
  %302 = vdwg.mxu0
  %s303 = scalar_lea.vmem [#allocation2], 16
  %v304 = vld [vmem:[%s303] sm:$0xff]
  %v305 = vadd.f32 %v304, %v301
  %v306 = vxor.u32 %v305, 2147483648
  %v307 = vmul.f32 %v306, 1.442695
  %v308 = vpow.pop %v307
  %v309 = vadd.f32 %v308, 1.0
  %v310 = vrcp.pop %v309
  %v311 = vmul.f32 %v309, %v310
  %v312 = vsub.f32 1.0, %v311
  %v313 = vmul.f32 %v310, %v312
  %v314 = vadd.f32 %v310, %v313
  %vm315 = vweird.f32 %v309
  %vm316 = vweird.f32 %v310
  %vm317 = vmor %vm315, %vm316
  %v318 = vsel %vm317, %v310, %v314
  %v319 = vand.u32 2147483647, %v309
  %vm320 = vcmp.eq.f32.partialorder %v319, 8.507059e+37
  %v321 = vand.u32 %v309, 2147483648
  %v322 = vor.u32 1.1754944e-38, %v321
  %v323 = vsel %vm320, %v322, %v318
  %v324 = vmul.f32 1.0, %v323
  %326 = vrot.lane.b32.xlu0 %v301, 64
  %v327 = vpop.permute.xlu0 %326
  %v329 = vmul.f32 %v324, %v327
  %331 = vrot.lane.b32.xlu0 %v329, 64
  %v332 = vpop.permute.xlu0 %331
  %v334 = vadd.f32 %v304, %v332
  %v335 = vtanh.pop %v334
  %v336 = vsub.f32 %v277, %v335
  %338 = vrot.lane.b32.xlu0 %v336, 96
  %v339 = vpop.permute.xlu0 %338
  %v341 = vmul.f32 %v324, %v339
  %343 = vrot.lane.b32.xlu0 %v341, 32
  %v344 = vpop.permute.xlu0 %343
  %v346 = vadd.f32 %v335, %v344
  %348 = vrot.lane.b32.xlu0 %v346, 64
  %v349 = vpop.permute.xlu0 %348
  %v350 = vsel %vm138, %v349, 0
  %352 = vmatpush.msra.mxu0 0.0
  %353 = vmatpush.msra.mxu0 0.0
  %354 = vmatpush.msra.mxu0 0.0
  %355 = vmatpush.msra.mxu0 0.0
  %356 = vmatpush.msra.mxu0 0.0
  %357 = vmatpush.msra.mxu0 0.0
  %358 = vmatpush.msra.mxu0 0.0
  %359 = vmatpush.msra.mxu0 0.0
  %360 = vmatpush.msra.mxu0 0.0
  %361 = vmatpush.msra.mxu0 0.0
  %362 = vmatpush.msra.mxu0 0.0
  %363 = vmatpush.msra.mxu0 0.0
  %364 = vmatpush.msra.mxu0 %v134
  %365 = vmatpush.msra.mxu0 %v133
  %366 = vmatpush.msra.mxu0 %v132
  %367 = vmatpush.msra.mxu0 %v131
  %368 = vmatmul.f32.gmra.mxu0 %v350
  %v369 = vpop.f32.mrf.mxu0
  %v370 = vadd.f32 %v136, %v369
  %371 = vdwg.mxu0
  %s372 = scalar_lea.vmem [#allocation2], 24
  %v373 = vld [vmem:[%s372] sm:$0xff]
  %v374 = vadd.f32 %v373, %v370
  %v375 = vxor.u32 %v374, 2147483648
  %v376 = vmul.f32 %v375, 1.442695
  %v377 = vpow.pop %v376
  %v378 = vadd.f32 %v377, 1.0
  %v379 = vrcp.pop %v378
  %v380 = vmul.f32 %v378, %v379
  %v381 = vsub.f32 1.0, %v380
  %v382 = vmul.f32 %v379, %v381
  %v383 = vadd.f32 %v379, %v382
  %vm384 = vweird.f32 %v378
  %vm385 = vweird.f32 %v379
  %vm386 = vmor %vm384, %vm385
  %v387 = vsel %vm386, %v379, %v383
  %v388 = vand.u32 2147483647, %v378
  %vm389 = vcmp.eq.f32.partialorder %v388, 8.507059e+37
  %v390 = vand.u32 %v378, 2147483648
  %v391 = vor.u32 1.1754944e-38, %v390
  %v392 = vsel %vm389, %v391, %v387
  %v393 = vmul.f32 1.0, %v392
  %395 = vrot.lane.b32.xlu0 %v370, 64
  %v396 = vpop.permute.xlu0 %395
  %v398 = vmul.f32 %v393, %v396
  %400 = vrot.lane.b32.xlu0 %v398, 64
  %v401 = vpop.permute.xlu0 %400
  %v403 = vadd.f32 %v373, %v401
  %v404 = vtanh.pop %v403
  %v405 = vsub.f32 %v346, %v404
  %407 = vrot.lane.b32.xlu0 %v405, 96
  %v408 = vpop.permute.xlu0 %407
  %v410 = vmul.f32 %v393, %v408
  %412 = vrot.lane.b32.xlu0 %v410, 32
  %v413 = vpop.permute.xlu0 %412
  %v415 = vadd.f32 %v404, %v413
  %417 = vrot.lane.b32.xlu0 %v415, 64
  %v418 = vpop.permute.xlu0 %417
  %v419 = vsel %vm138, %v418, 0
  %421 = vmatpush.msra.mxu0 0.0
  %422 = vmatpush.msra.mxu0 0.0
  %423 = vmatpush.msra.mxu0 0.0
  %424 = vmatpush.msra.mxu0 0.0
  %425 = vmatpush.msra.mxu0 0.0
  %426 = vmatpush.msra.mxu0 0.0
  %427 = vmatpush.msra.mxu0 0.0
  %428 = vmatpush.msra.mxu0 0.0
  %429 = vmatpush.msra.mxu0 0.0
  %430 = vmatpush.msra.mxu0 0.0
  %431 = vmatpush.msra.mxu0 0.0
  %432 = vmatpush.msra.mxu0 0.0
  %433 = vmatpush.msra.mxu0 %v134
  %434 = vmatpush.msra.mxu0 %v133
  %435 = vmatpush.msra.mxu0 %v132
  %436 = vmatpush.msra.mxu0 %v131
  %437 = vmatmul.f32.gmra.mxu0 %v419
  %v438 = vpop.f32.mrf.mxu0
  %v439 = vadd.f32 %v136, %v438
  %440 = vdwg.mxu0
  %s441 = scalar_lea.vmem [#allocation2], 32
  %v442 = vld [vmem:[%s441] sm:$0xff]
  %v443 = vadd.f32 %v442, %v439
  %v444 = vxor.u32 %v443, 2147483648
  %v445 = vmul.f32 %v444, 1.442695
  %v446 = vpow.pop %v445
  %v447 = vadd.f32 %v446, 1.0
  %v448 = vrcp.pop %v447
  %v449 = vmul.f32 %v447, %v448
  %v450 = vsub.f32 1.0, %v449
  %v451 = vmul.f32 %v448, %v450
  %v452 = vadd.f32 %v448, %v451
  %vm453 = vweird.f32 %v447
  %vm454 = vweird.f32 %v448
  %vm455 = vmor %vm453, %vm454
  %v456 = vsel %vm455, %v448, %v452
  %v457 = vand.u32 2147483647, %v447
  %vm458 = vcmp.eq.f32.partialorder %v457, 8.507059e+37
  %v459 = vand.u32 %v447, 2147483648
  %v460 = vor.u32 1.1754944e-38, %v459
  %v461 = vsel %vm458, %v460, %v456
  %v462 = vmul.f32 1.0, %v461
  %464 = vrot.lane.b32.xlu0 %v439, 64
  %v465 = vpop.permute.xlu0 %464
  %v467 = vmul.f32 %v462, %v465
  %469 = vrot.lane.b32.xlu0 %v467, 64
  %v470 = vpop.permute.xlu0 %469
  %v472 = vadd.f32 %v442, %v470
  %v473 = vtanh.pop %v472
  %v474 = vsub.f32 %v415, %v473
  %476 = vrot.lane.b32.xlu0 %v474, 96
  %v477 = vpop.permute.xlu0 %476
  %v479 = vmul.f32 %v462, %v477
  %481 = vrot.lane.b32.xlu0 %v479, 32
  %v482 = vpop.permute.xlu0 %481
  %v484 = vadd.f32 %v473, %v482
  %486 = vrot.lane.b32.xlu0 %v484, 64
  %v487 = vpop.permute.xlu0 %486
  %v488 = vsel %vm138, %v487, 0
  %490 = vmatpush.msra.mxu0 0.0
  %491 = vmatpush.msra.mxu0 0.0
  %492 = vmatpush.msra.mxu0 0.0
  %493 = vmatpush.msra.mxu0 0.0
  %494 = vmatpush.msra.mxu0 0.0
  %495 = vmatpush.msra.mxu0 0.0
  %496 = vmatpush.msra.mxu0 0.0
  %497 = vmatpush.msra.mxu0 0.0
  %498 = vmatpush.msra.mxu0 0.0
  %499 = vmatpush.msra.mxu0 0.0
  %500 = vmatpush.msra.mxu0 0.0
  %501 = vmatpush.msra.mxu0 0.0
  %502 = vmatpush.msra.mxu0 %v134
  %503 = vmatpush.msra.mxu0 %v133
  %504 = vmatpush.msra.mxu0 %v132
  %505 = vmatpush.msra.mxu0 %v131
  %506 = vmatmul.f32.gmra.mxu0 %v488
  %v507 = vpop.f32.mrf.mxu0
  %v508 = vadd.f32 %v136, %v507
  %509 = vdwg.mxu0
  %s510 = scalar_lea.vmem [#allocation2], 40
  %v511 = vld [vmem:[%s510] sm:$0xff]
  %v512 = vadd.f32 %v511, %v508
  %v513 = vxor.u32 %v512, 2147483648
  %v514 = vmul.f32 %v513, 1.442695
  %v515 = vpow.pop %v514
  %v516 = vadd.f32 %v515, 1.0
  %v517 = vrcp.pop %v516
  %v518 = vmul.f32 %v516, %v517
  %v519 = vsub.f32 1.0, %v518
  %v520 = vmul.f32 %v517, %v519
  %v521 = vadd.f32 %v517, %v520
  %vm522 = vweird.f32 %v516
  %vm523 = vweird.f32 %v517
  %vm524 = vmor %vm522, %vm523
  %v525 = vsel %vm524, %v517, %v521
  %v526 = vand.u32 2147483647, %v516
  %vm527 = vcmp.eq.f32.partialorder %v526, 8.507059e+37
  %v528 = vand.u32 %v516, 2147483648
  %v529 = vor.u32 1.1754944e-38, %v528
  %v530 = vsel %vm527, %v529, %v525
  %v531 = vmul.f32 1.0, %v530
  %533 = vrot.lane.b32.xlu0 %v508, 64
  %v534 = vpop.permute.xlu0 %533
  %v536 = vmul.f32 %v531, %v534
  %538 = vrot.lane.b32.xlu0 %v536, 64
  %v539 = vpop.permute.xlu0 %538
  %v541 = vadd.f32 %v511, %v539
  %v542 = vtanh.pop %v541
  %v543 = vsub.f32 %v484, %v542
  %545 = vrot.lane.b32.xlu0 %v543, 96
  %v546 = vpop.permute.xlu0 %545
  %v548 = vmul.f32 %v531, %v546
  %550 = vrot.lane.b32.xlu0 %v548, 32
  %v551 = vpop.permute.xlu0 %550
  %v553 = vadd.f32 %v542, %v551
  %555 = vrot.lane.b32.xlu0 %v553, 64
  %v556 = vpop.permute.xlu0 %555
  %v557 = vsel %vm138, %v556, 0
  %559 = vmatpush.msra.mxu0 0.0
  %560 = vmatpush.msra.mxu0 0.0
  %561 = vmatpush.msra.mxu0 0.0
  %562 = vmatpush.msra.mxu0 0.0
  %563 = vmatpush.msra.mxu0 0.0
  %564 = vmatpush.msra.mxu0 0.0
  %565 = vmatpush.msra.mxu0 0.0
  %566 = vmatpush.msra.mxu0 0.0
  %567 = vmatpush.msra.mxu0 0.0
  %568 = vmatpush.msra.mxu0 0.0
  %569 = vmatpush.msra.mxu0 0.0
  %570 = vmatpush.msra.mxu0 0.0
  %571 = vmatpush.msra.mxu0 %v134
  %572 = vmatpush.msra.mxu0 %v133
  %573 = vmatpush.msra.mxu0 %v132
  %574 = vmatpush.msra.mxu0 %v131
  %575 = vmatmul.f32.gmra.mxu0 %v557
  %v576 = vpop.f32.mrf.mxu0
  %v577 = vadd.f32 %v136, %v576
  %578 = vdwg.mxu0
  %s579 = scalar_lea.vmem [#allocation2], 48
  %v580 = vld [vmem:[%s579] sm:$0xff]
  %v581 = vadd.f32 %v580, %v577
  %v582 = vxor.u32 %v581, 2147483648
  %v583 = vmul.f32 %v582, 1.442695
  %v584 = vpow.pop %v583
  %v585 = vadd.f32 %v584, 1.0
  %v586 = vrcp.pop %v585
  %v587 = vmul.f32 %v585, %v586
  %v588 = vsub.f32 1.0, %v587
  %v589 = vmul.f32 %v586, %v588
  %v590 = vadd.f32 %v586, %v589
  %vm591 = vweird.f32 %v585
  %vm592 = vweird.f32 %v586
  %vm593 = vmor %vm591, %vm592
  %v594 = vsel %vm593, %v586, %v590
  %v595 = vand.u32 2147483647, %v585
  %vm596 = vcmp.eq.f32.partialorder %v595, 8.507059e+37
  %v597 = vand.u32 %v585, 2147483648
  %v598 = vor.u32 1.1754944e-38, %v597
  %v599 = vsel %vm596, %v598, %v594
  %v600 = vmul.f32 1.0, %v599
  %602 = vrot.lane.b32.xlu0 %v577, 64
  %v603 = vpop.permute.xlu0 %602
  %v605 = vmul.f32 %v600, %v603
  %607 = vrot.lane.b32.xlu0 %v605, 64
  %v608 = vpop.permute.xlu0 %607
  %v610 = vadd.f32 %v580, %v608
  %v611 = vtanh.pop %v610
  %v612 = vsub.f32 %v553, %v611
  %614 = vrot.lane.b32.xlu0 %v612, 96
  %v615 = vpop.permute.xlu0 %614
  %v617 = vmul.f32 %v600, %v615
  %619 = vrot.lane.b32.xlu0 %v617, 32
  %v620 = vpop.permute.xlu0 %619
  %v622 = vadd.f32 %v611, %v620
  %624 = vrot.lane.b32.xlu0 %v622, 64
  %v625 = vpop.permute.xlu0 %624
  %v626 = vsel %vm138, %v625, 0
  %628 = vmatpush.msra.mxu0 0.0
  %629 = vmatpush.msra.mxu0 0.0
  %630 = vmatpush.msra.mxu0 0.0
  %631 = vmatpush.msra.mxu0 0.0
  %632 = vmatpush.msra.mxu0 0.0
  %633 = vmatpush.msra.mxu0 0.0
  %634 = vmatpush.msra.mxu0 0.0
  %635 = vmatpush.msra.mxu0 0.0
  %636 = vmatpush.msra.mxu0 0.0
  %637 = vmatpush.msra.mxu0 0.0
  %638 = vmatpush.msra.mxu0 0.0
  %639 = vmatpush.msra.mxu0 0.0
  %640 = vmatpush.msra.mxu0 %v134
  %641 = vmatpush.msra.mxu0 %v133
  %642 = vmatpush.msra.mxu0 %v132
  %643 = vmatpush.msra.mxu0 %v131
  %644 = vmatmul.f32.gmra.mxu0 %v626
  %v645 = vpop.f32.mrf.mxu0
  %v646 = vadd.f32 %v136, %v645
  %647 = vdwg.mxu0
  %s648 = scalar_lea.vmem [#allocation2], 56
  %v649 = vld [vmem:[%s648] sm:$0xff]
  %v650 = vadd.f32 %v649, %v646
  %v651 = vxor.u32 %v650, 2147483648
  %v652 = vmul.f32 %v651, 1.442695
  %v653 = vpow.pop %v652
  %v654 = vadd.f32 %v653, 1.0
  %v655 = vrcp.pop %v654
  %v656 = vmul.f32 %v654, %v655
  %v657 = vsub.f32 1.0, %v656
  %v658 = vmul.f32 %v655, %v657
  %v659 = vadd.f32 %v655, %v658
  %vm660 = vweird.f32 %v654
  %vm661 = vweird.f32 %v655
  %vm662 = vmor %vm660, %vm661
  %v663 = vsel %vm662, %v655, %v659
  %v664 = vand.u32 2147483647, %v654
  %vm665 = vcmp.eq.f32.partialorder %v664, 8.507059e+37
  %v666 = vand.u32 %v654, 2147483648
  %v667 = vor.u32 1.1754944e-38, %v666
  %v668 = vsel %vm665, %v667, %v663
  %v669 = vmul.f32 1.0, %v668
  %671 = vrot.lane.b32.xlu0 %v646, 64
  %v672 = vpop.permute.xlu0 %671
  %v674 = vmul.f32 %v669, %v672
  %676 = vrot.lane.b32.xlu0 %v674, 64
  %v677 = vpop.permute.xlu0 %676
  %v679 = vadd.f32 %v649, %v677
  %v680 = vtanh.pop %v679
  %v681 = vsub.f32 %v622, %v680
  %683 = vrot.lane.b32.xlu0 %v681, 96
  %v684 = vpop.permute.xlu0 %683
  %v686 = vmul.f32 %v669, %v684
  %688 = vrot.lane.b32.xlu0 %v686, 32
  %v689 = vpop.permute.xlu0 %688
  %v691 = vadd.f32 %v680, %v689
  %693 = vrot.lane.b32.xlu0 %v691, 64
  %v694 = vpop.permute.xlu0 %693
  %696 = vst.msk [vmem:[#allocation3] sm:$0xff] %vm138, %v694
  // Predicated region
  $region38: #{gru_forward.1} parent=0 // pred_check
    %p697 = pneg %p33
  $region39: #{gru_forward.1} parent=0 // pred_check_branch
    %699 = sbr.rel (%p697) target = $region41
  $region40: #{gru_forward.1} parent=0 // pred_region
    %700 = vst.msk [vmem:[%s8] sm:$0xff] %vm138, %v694
    %v701 = vld [vmem:[%s6] sm:$0x1]
    %v703 = vperm.slane %v701, 0
    %704 = vrot.lane.b32.xlu0 %v703, 64
    %v705 = vpop.permute.xlu0 %704
    %v707 = vmul.f32 %v691, %v705
    %709 = vrot.lane.b32.xlu0 %v707, 64
    %v710 = vpop.permute.xlu0 %709
    %v712 = vsel %vm138, %v710, 0.0
    %713 = vadd.xlane.f32.xlu0 %v712
    %v714 = vpop.xlane.xlu0 %713
    %v715 = vld [vmem:[#allocation4] sm:$0x1]
    %v717 = vperm.slane %v715, 0
    %v719 = vadd.f32 %v714, %v717
    %vm720 = vcmask 7168
    %721 = vst.msk [vmem:[%s9] sm:$0xff] %vm720, %v719
  $region41: #{gru_forward.1} parent=0 // pred_fallthru
    _
  // Predicated region
  $region42: #{gru_forward.1} parent=0 // pred_check
    _
  $region43: #{gru_forward.1} parent=0 // pred_check_branch
    %723 = sbr.rel (0) target = $region45
  $region44: #{gru_forward.1} parent=0 // pred_region
    _
  $region45: #{gru_forward.1} parent=0 // pred_fallthru
    _
  // Predicated region
  $region46: #{gru_forward.1} parent=0 // pred_check
    _
  $region47: #{gru_forward.1} parent=0 // pred_check_branch
    %725 = sbr.rel (0) target = $region49
  $region48: #{gru_forward.1} parent=0 // pred_region
    _
  $region49: #{gru_forward.1} parent=0 // pred_fallthru
    _
  // Predicated region
  $region50: #{gru_forward.1} parent=0 // pred_check
    _
  $region51: #{gru_forward.1} parent=0 // pred_check_branch
    %727 = sbr.rel (0) target = $region53
  $region52: #{gru_forward.1} parent=0 // pred_region
    _
  $region53: #{gru_forward.1} parent=0 // pred_fallthru
    _
  // Predicated region
  $region54: #{gru_forward.1} parent=0 // pred_check
    _
  $region55: #{gru_forward.1} parent=0 // pred_check_branch
    %729 = sbr.rel (0) target = $region57
  $region56: #{gru_forward.1} parent=0 // pred_region
    _
  $region57: #{gru_forward.1} parent=0 // pred_fallthru
    _

</llo_original>
